<compile_context>
chip_gen: v5e
topology: v5e:2x2
jax: 0.10.0
libtpu: 0.0.40
codegen_flags: <defaults>
</compile_context>

<pallas_src>
import math

import jax
import jax.numpy as jnp
from jax import lax
from jax.experimental import pallas as pl
from jax.experimental.pallas import tpu as pltpu


# Contract the last dim of both operands: a(M,K) . b(N,K) -> (M,N)  (a @ b.T)
_NT_DIMS = (((1,), (1,)), ((), ()))


def lora_linear_kernel(x_ref, w_ref, xa_ref, b_ref, bias_ref, o_ref, acc_ref):
    """acc = bias + xa @ B.T + sum_k x_k @ W_k.T ; o = acc (cast)."""
    k = pl.program_id(2)
    nk = pl.num_programs(2)

    @pl.when(k == 0)
    def _init():
        # k-independent terms folded into the accumulator init:
        #   LoRA delta (tm,R)x(tn,R) GEMM + broadcast bias (1,tn).
        acc_ref[...] = (
            lax.dot_general(xa_ref[...], b_ref[...], _NT_DIMS,
                            preferred_element_type=jnp.float32)
            + bias_ref[...].astype(jnp.float32)
        )

    # Frozen path: (tm, tk) x (tn, tk) -> (tm, tn), f32 accumulation on the MXU.
    acc_ref[...] += lax.dot_general(x_ref[...], w_ref[...], _NT_DIMS,
                                    preferred_element_type=jnp.float32)

    @pl.when(k == nk - 1)
    def _finalize():
        o_ref[...] = acc_ref[...].astype(o_ref.dtype)


def _default_vmem_limit_bytes():
    """Generation-aware scoped-VMEM limit (~75% of physical), safe fallback."""
    try:
        cap = pltpu.get_tpu_info().vmem_capacity_bytes
    except Exception:
        cap = 64 << 20
    return int(cap * 3 // 4)


def lora_linear(x, w, lora_a, lora_b, bias, *, scale,
                block_m=512, block_n=512, block_k=512,
                vmem_limit_bytes=None):
    """x: (M, K); w: (N, K) PyTorch layout; lora_a: (R, K); lora_b: (N, R);
    bias: (N,).  Returns (M, N) = x @ (W + scale * B @ A).T + bias."""
    M, K = x.shape
    N, K2 = w.shape
    assert K2 == K
    R = lora_a.shape[0]
    assert lora_a.shape == (R, K) and lora_b.shape == (N, R)
    assert bias.shape == (N,)

    # Hoist the rank-R projection out of the grid: tiny (M, R) operand,
    # computed once instead of once per N tile.  Scale folded in here.
    xa = scale * jnp.dot(x, lora_a.T, preferred_element_type=jnp.float32)
    xa = xa.astype(x.dtype)

    # Clamp tiles to the problem (small-M/decode ⇒ single i block ⇒ W read once).
    block_m = min(block_m, M)
    block_n = min(block_n, N)
    block_k = min(block_k, K)
    assert M % block_m == 0, "pad M to a multiple of block_m"
    assert N % block_n == 0, "pad N to a multiple of block_n"
    assert K % block_k == 0, "pad K to a multiple of block_k"

    if vmem_limit_bytes is None:
        vmem_limit_bytes = _default_vmem_limit_bytes()

    bias2d = bias.reshape(1, N)
    grid = (M // block_m, N // block_n, K // block_k)

    return pl.pallas_call(
        lora_linear_kernel,
        out_shape=jax.ShapeDtypeStruct((M, N), x.dtype),
        grid=grid,
        in_specs=[
            pl.BlockSpec((block_m, block_k), lambda i, j, k: (i, k)),   # x tile
            pl.BlockSpec((block_n, block_k), lambda i, j, k: (j, k)),   # frozen W tile
            pl.BlockSpec((block_m, R),       lambda i, j, k: (i, 0)),   # xa = scale*x@A.T
            pl.BlockSpec((block_n, R),       lambda i, j, k: (j, 0)),   # lora_b tile
            pl.BlockSpec((1, block_n),       lambda i, j, k: (0, j)),   # bias tile
        ],
        out_specs=pl.BlockSpec((block_m, block_n), lambda i, j, k: (i, j)),
        scratch_shapes=[pltpu.VMEM((block_m, block_n), jnp.float32)],   # f32 acc
        compiler_params=pltpu.CompilerParams(
            dimension_semantics=("parallel", "parallel", "arbitrary"),
            vmem_limit_bytes=vmem_limit_bytes,
        ),
    )(x, w, xa, lora_b, bias2d)


def init_params(key, in_features, out_features, rank):
    """Deterministic init matching the PyTorch module's __init__."""
    k_w, k_bias, k_a = jax.random.split(key, 3)

    # nn.Linear default: kaiming_uniform_(weight, a=sqrt(5)) -> U(-1/sqrt(fan_in), 1/sqrt(fan_in))
    bound_w = 1.0 / math.sqrt(in_features)
    w = jax.random.uniform(k_w, (out_features, in_features),
                           minval=-bound_w, maxval=bound_w, dtype=jnp.float32)
    bias = jax.random.uniform(k_bias, (out_features,),
                              minval=-bound_w, maxval=bound_w, dtype=jnp.float32)

    # nn.init.kaiming_normal_(lora_a, a=sqrt(5)): std = sqrt(2/(1+a^2)) / sqrt(fan_in)
    std_a = math.sqrt(2.0 / (1.0 + 5.0)) / math.sqrt(in_features)
    lora_a = std_a * jax.random.normal(k_a, (rank, in_features), dtype=jnp.float32)

    # nn.init.zeros_(lora_b)
    lora_b = jnp.zeros((out_features, rank), dtype=jnp.float32)
    return w, bias, lora_a, lora_b


def _reference(x, w, lora_a, lora_b, bias, scale):
    w_eff = w + scale * (lora_b @ lora_a)
    return x @ w_eff.T + bias[None, :]


if __name__ == "__main__":
    in_features = 32
    out_features = 64
    rank = 16
    lora_alpha = 16
    scale = lora_alpha / rank
    batch = 16

    key = jax.random.PRNGKey(0)
    k_x, k_p, k_b = jax.random.split(key, 3)
    x = jax.random.normal(k_x, (batch, in_features), dtype=jnp.float32)
    w, bias, lora_a, lora_b = init_params(k_p, in_features, out_features, rank)

    # 1) Module-faithful init (lora_b == 0).
    y0 = jax.block_until_ready(
        lora_linear(x, w, lora_a, lora_b, bias, scale=scale))
    y0_ref = _reference(x, w, lora_a, lora_b, bias, scale)
    assert y0.shape == (batch, out_features)
    assert jnp.allclose(y0, y0_ref, atol=1e-5, rtol=1e-5), "mismatch (zero lora_b)"

    # 2) Non-zero lora_b so the LoRA path is actually exercised numerically.
    lora_b_nz = 0.1 * jax.random.normal(k_b, (out_features, rank), dtype=jnp.float32)
    y1 = jax.block_until_ready(
        lora_linear(x, w, lora_a, lora_b_nz, bias, scale=scale))
    y1_ref = _reference(x, w, lora_a, lora_b_nz, bias, scale)
    assert jnp.allclose(y1, y1_ref, atol=1e-5, rtol=1e-5), "mismatch (nonzero lora_b)"

    print("KERNEL_OK")
</pallas_src>

<mosaic_0001>
module attributes {stable_mosaic.version = 11 : i64} {
  func.func @lora_linear_kernel(%arg0: i32, %arg1: i32, %arg2: i32, %arg3: memref<16x32xf32, #tpu.memory_space<vmem>>, %arg4: memref<64x32xf32, #tpu.memory_space<vmem>>, %arg5: memref<16x16xf32, #tpu.memory_space<vmem>>, %arg6: memref<64x16xf32, #tpu.memory_space<vmem>>, %arg7: memref<1x64xf32, #tpu.memory_space<vmem>>, %arg8: memref<16x64xf32, #tpu.memory_space<vmem>>, %arg9: memref<16x64xf32, #tpu.memory_space<vmem>>) attributes {dimension_semantics = [#tpu.dimension_semantics<parallel>, #tpu.dimension_semantics<parallel>, #tpu.dimension_semantics<arbitrary>], iteration_bounds = array<i64: 1, 1, 1>, scalar_prefetch = 0 : i64, scratch_operands = 1 : i64, tpu.core_type = #tpu.core_type<tc>, window_params = [{transform_indices = @transform_0, window_bounds = array<i64: 16, 32>}, {transform_indices = @transform_1, window_bounds = array<i64: 64, 32>}, {transform_indices = @transform_2, window_bounds = array<i64: 16, 16>}, {transform_indices = @transform_3, window_bounds = array<i64: 64, 16>}, {transform_indices = @transform_4, window_bounds = array<i64: 1, 64>}, {transform_indices = @transform_5, window_bounds = array<i64: 16, 64>}]} {
    %c0_i32 = arith.constant 0 : i32
    %0 = arith.cmpi eq, %arg2, %c0_i32 : i32
    %1 = arith.extui %0 : i1 to i32
    %c0_i32_0 = arith.constant 0 : i32
    %2 = arith.cmpi ne, %1, %c0_i32_0 : i32
    scf.if %2 {
      %c0_10 = arith.constant 0 : index
      %c0_11 = arith.constant 0 : index
      %12 = vector.load %arg5[%c0_10, %c0_11] : memref<16x16xf32, #tpu.memory_space<vmem>>, vector<16x16xf32>
      %c0_12 = arith.constant 0 : index
      %c0_13 = arith.constant 0 : index
      %13 = vector.load %arg6[%c0_12, %c0_13] : memref<64x16xf32, #tpu.memory_space<vmem>>, vector<64x16xf32>
      %cst_14 = arith.constant dense<0.000000e+00> : vector<16x64xf32>
      %14 = tpu.matmul %12, %13, %cst_14 {dimension_numbers = #tpu.dot_dimension_numbers<[1], [1], [0], [0], [0, 0, 1, 0], [], []>} : vector<16x16xf32>, vector<64x16xf32>, vector<16x64xf32> -> vector<16x64xf32>
      %c0_15 = arith.constant 0 : index
      %c0_16 = arith.constant 0 : index
      %15 = vector.load %arg7[%c0_15, %c0_16] : memref<1x64xf32, #tpu.memory_space<vmem>>, vector<1x64xf32>
      %16 = vector.broadcast %15 : vector<1x64xf32> to vector<16x64xf32>
      %17 = arith.addf %14, %16 : vector<16x64xf32>
      %c0_17 = arith.constant 0 : index
      %c0_18 = arith.constant 0 : index
      %18 = vector.load %arg9[%c0_17, %c0_18] : memref<16x64xf32, #tpu.memory_space<vmem>>, vector<16x64xf32>
      tpu.vector_store %arg9[%c0_17, %c0_18], %17 {strides = array<i32>} : memref<16x64xf32, #tpu.memory_space<vmem>>, vector<16x64xf32>,
    } else {
    }
    %c0 = arith.constant 0 : index
    %c0_1 = arith.constant 0 : index
    %3 = vector.load %arg9[%c0, %c0_1] : memref<16x64xf32, #tpu.memory_space<vmem>>, vector<16x64xf32>
    %c0_2 = arith.constant 0 : index
    %c0_3 = arith.constant 0 : index
    %4 = vector.load %arg3[%c0_2, %c0_3] : memref<16x32xf32, #tpu.memory_space<vmem>>, vector<16x32xf32>
    %c0_4 = arith.constant 0 : index
    %c0_5 = arith.constant 0 : index
    %5 = vector.load %arg4[%c0_4, %c0_5] : memref<64x32xf32, #tpu.memory_space<vmem>>, vector<64x32xf32>
    %cst = arith.constant dense<0.000000e+00> : vector<16x64xf32>
    %6 = tpu.matmul %4, %5, %cst {dimension_numbers = #tpu.dot_dimension_numbers<[1], [1], [0], [0], [0, 0, 1, 0], [], []>} : vector<16x32xf32>, vector<64x32xf32>, vector<16x64xf32> -> vector<16x64xf32>
    %7 = arith.addf %3, %6 : vector<16x64xf32>
    %c0_6 = arith.constant 0 : index
    %c0_7 = arith.constant 0 : index
    %8 = vector.load %arg9[%c0_6, %c0_7] : memref<16x64xf32, #tpu.memory_space<vmem>>, vector<16x64xf32>
    tpu.vector_store %arg9[%c0_6, %c0_7], %7 {strides = array<i32>} : memref<16x64xf32, #tpu.memory_space<vmem>>, vector<16x64xf32>,
    %c0_i32_8 = arith.constant 0 : i32
    %9 = arith.cmpi eq, %arg2, %c0_i32_8 : i32
    %10 = arith.extui %9 : i1 to i32
    %c0_i32_9 = arith.constant 0 : i32
    %11 = arith.cmpi ne, %10, %c0_i32_9 : i32
    scf.if %11 {
      %c0_10 = arith.constant 0 : index
      %c0_11 = arith.constant 0 : index
      %12 = vector.load %arg9[%c0_10, %c0_11] : memref<16x64xf32, #tpu.memory_space<vmem>>, vector<16x64xf32>
      %c0_12 = arith.constant 0 : index
      %c0_13 = arith.constant 0 : index
      %13 = vector.load %arg8[%c0_12, %c0_13] : memref<16x64xf32, #tpu.memory_space<vmem>>, vector<16x64xf32>
      tpu.vector_store %arg8[%c0_12, %c0_13], %12 {strides = array<i32>} : memref<16x64xf32, #tpu.memory_space<vmem>>, vector<16x64xf32>,
    } else {
    }
    return
  }
  func.func @transform_0(%arg0: i32, %arg1: i32, %arg2: i32) -> (i32, i32) {
    %c0_i32 = arith.constant 0 : i32
    return %arg0, %arg2 : i32, i32
  }
  func.func @transform_1(%arg0: i32, %arg1: i32, %arg2: i32) -> (i32, i32) {
    %c0_i32 = arith.constant 0 : i32
    return %arg1, %arg2 : i32, i32
  }
  func.func @transform_2(%arg0: i32, %arg1: i32, %arg2: i32) -> (i32, i32) {
    %c0_i32 = arith.constant 0 : i32
    %c0_i32_0 = arith.constant 0 : i32
    return %arg0, %c0_i32 : i32, i32
  }
  func.func @transform_3(%arg0: i32, %arg1: i32, %arg2: i32) -> (i32, i32) {
    %c0_i32 = arith.constant 0 : i32
    %c0_i32_0 = arith.constant 0 : i32
    return %arg1, %c0_i32 : i32, i32
  }
  func.func @transform_4(%arg0: i32, %arg1: i32, %arg2: i32) -> (i32, i32) {
    %c0_i32 = arith.constant 0 : i32
    %c0_i32_0 = arith.constant 0 : i32
    return %c0_i32, %arg1 : i32, i32
  }
  func.func @transform_5(%arg0: i32, %arg1: i32, %arg2: i32) -> (i32, i32) {
    %c0_i32 = arith.constant 0 : i32
    return %arg0, %arg1 : i32, i32
  }
}

</mosaic_0001>

<llo_original>
// kernel: tpu_custom_call.1
$region0: #{tpu_custom_call.1}
  #allocation0 [shape = 'u32[]', space=smem, size = 0x4, offset = 0x4, fixed_abs, tag = 'smem constant byte address 0x4 - core index']
  #allocation1 [shape = 'u32[72,128]{1,0:T(1,128)}', space=vmem, size = 0x9000, scoped, tag = 'internal scratch']
  #allocation2 [shape = 'f32[16,64]{1,0:T(8,128)}', space=vmem, size = 0x2000, scoped, tag = 'scratch operand']
  %s0 = inlined_call_operand.vmem [shape: f32[16,32], index: 0, kind: input, shape index: {}]
  %s1 = inlined_call_operand.vmem [shape: f32[64,32], index: 1, kind: input, shape index: {}]
  %s2 = inlined_call_operand.vmem [shape: f32[16,16], index: 2, kind: input, shape index: {}]
  %s3 = inlined_call_operand.vmem [shape: f32[64,16], index: 3, kind: input, shape index: {}]
  %s4 = inlined_call_operand.vmem [shape: f32[1,64], index: 4, kind: input, shape index: {}]
  %s5 = inlined_call_operand.hbm [shape: f32[16,64], index: 5, kind: output, shape index: {}]
  %s6 = sld [smem:[#allocation0]]
  $region38: #{tpu_custom_call.1} parent=0
    _
  %s8 = ssub.s32 1, %s6
  %s9 = scalar_select 0, %s8, %s6
  $region1: #{tpu_custom_call.1} parent=0
    #allocation3 [shape = 'u8[8192]{0}', space=vmem, size = 0x2000, scoped, tag = 'output window, operand 0, single buffered']
    #allocation4 [shape = 's32[1]{0}', space=sflag, size = 0x4, scoped, tag = 'scoped memory for tpu_custom_call.1']
    %10 = vsyncpa [#allocation4], 0
    // Predicated region
    $region2: #{tpu_custom_call.1} parent=1 // pred_check
      _
    $region3: #{tpu_custom_call.1} parent=1 // pred_check_branch
      %12 = sbr.rel (0) target = $region5
    $region4: #{tpu_custom_call.1} parent=1 // pred_region
      _
    $region5: #{tpu_custom_call.1} parent=1 // pred_fallthru
      _
    // Predicated region
    $region6: #{tpu_custom_call.1} parent=1 // pred_check
      _
    $region7: #{tpu_custom_call.1} parent=1 // pred_check_branch
      %14 = sbr.rel (0) target = $region9
    $region8: #{tpu_custom_call.1} parent=1 // pred_region
      _
    $region9: #{tpu_custom_call.1} parent=1 // pred_fallthru
      _
    // Predicated region
    $region10: #{tpu_custom_call.1} parent=1 // pred_check
      _
    $region11: #{tpu_custom_call.1} parent=1 // pred_check_branch
      %16 = sbr.rel (0) target = $region13
    $region12: #{tpu_custom_call.1} parent=1 // pred_region
      _
    $region13: #{tpu_custom_call.1} parent=1 // pred_fallthru
      _
    // Predicated region
    $region14: #{tpu_custom_call.1} parent=1 // pred_check
      _
    $region15: #{tpu_custom_call.1} parent=1 // pred_check_branch
      %18 = sbr.rel (0) target = $region17
    $region16: #{tpu_custom_call.1} parent=1 // pred_region
      _
    $region17: #{tpu_custom_call.1} parent=1 // pred_fallthru
      _
    // Predicated region
    $region18: #{tpu_custom_call.1} parent=1 // pred_check
      _
    $region19: #{tpu_custom_call.1} parent=1 // pred_check_branch
      %20 = sbr.rel (0) target = $region21
    $region20: #{tpu_custom_call.1} parent=1 // pred_region
      _
    $region21: #{tpu_custom_call.1} parent=1 // pred_fallthru
      _
    %p21 = scmp.eq.s32.totalorder 0, 0
    // Predicated region
    $region22: #{tpu_custom_call.1} parent=1 // pred_check
      %p22 = pneg %p21
    $region23: #{tpu_custom_call.1} parent=1 // pred_check_branch
      %24 = sbr.rel (%p22) target = $region25
    $region24: #{tpu_custom_call.1} parent=1 // pred_region
      %v25 = vld [vmem:[%s2] sm:$0xff]
      %v26 = vld [vmem:[%s2 + $0x8] sm:$0xff]
      %v27 = vld [vmem:[%s3] sm:$0xff]
      %v28 = vld [vmem:[%s3 + $0x8] sm:$0xff]
      %v29 = vld [vmem:[%s3 + $0x10] sm:$0xff]
      %v30 = vld [vmem:[%s3 + $0x18] sm:$0xff]
      %v31 = vld [vmem:[%s3 + $0x20] sm:$0xff]
      %v32 = vld [vmem:[%s3 + $0x28] sm:$0xff]
      %v33 = vld [vmem:[%s3 + $0x30] sm:$0xff]
      %v34 = vld [vmem:[%s3 + $0x38] sm:$0xff]
      %v35 = vld [vmem:[%s4] sm:$0x1]
      %v37 = vperm.slane %v35, 0
      %vm39 = vcmask 130048
      %v41 = vsel %vm39, %v25, 0
      %v44 = vsel %vm39, %v26, 0
      %v47 = vsel %vm39, %v27, 0
      %v50 = vsel %vm39, %v28, 0
      %v53 = vsel %vm39, %v29, 0
      %v56 = vsel %vm39, %v30, 0
      %v59 = vsel %vm39, %v31, 0
      %v62 = vsel %vm39, %v32, 0
      %v65 = vsel %vm39, %v33, 0
      %v68 = vsel %vm39, %v34, 0
      %70 = vmatpush.xpose.msra.mxu0 0.0
      %71 = vmatpush.xpose.msra.mxu0 0.0
      %72 = vmatpush.xpose.msra.mxu0 0.0
      %73 = vmatpush.xpose.msra.mxu0 0.0
      %74 = vmatpush.xpose.msra.mxu0 0.0
      %75 = vmatpush.xpose.msra.mxu0 0.0
      %76 = vmatpush.xpose.msra.mxu0 0.0
      %77 = vmatpush.xpose.msra.mxu0 0.0
      %78 = vmatpush.xpose.msra.mxu0 %v68
      %79 = vmatpush.xpose.msra.mxu0 %v65
      %80 = vmatpush.xpose.msra.mxu0 %v62
      %81 = vmatpush.xpose.msra.mxu0 %v59
      %82 = vmatpush.xpose.msra.mxu0 %v56
      %83 = vmatpush.xpose.msra.mxu0 %v53
      %84 = vmatpush.xpose.msra.mxu0 %v50
      %85 = vmatpush.xpose.msra.mxu0 %v47
      %86 = vmatmul.f32.gmra.mxu0 %v41
      %v87 = vpop.f32.mrf.mxu0
      %v88 = vadd.f32 %v37, %v87
      %89 = vmatmul.f32.gmra.mxu0 %v44
      %v90 = vpop.f32.mrf.mxu0
      %v91 = vadd.f32 %v37, %v90
      %92 = vdwg.mxu0
      %vm93 = vcmask 523264
      %94 = vst.msk [vmem:[#allocation2] sm:$0xff] %vm93, %v88
      %95 = vst.msk [vmem:[#allocation2 + $0x8] sm:$0xff] %vm93, %v91
    $region25: #{tpu_custom_call.1} parent=1 // pred_fallthru
      _
    %v96 = vld [vmem:[#allocation2] sm:$0xff]
    %v97 = vld [vmem:[#allocation2 + $0x8] sm:$0xff]
    %v98 = vld [vmem:[%s0] sm:$0xff]
    %v99 = vld [vmem:[%s0 + $0x8] sm:$0xff]
    %v100 = vld [vmem:[%s1] sm:$0xff]
    %v101 = vld [vmem:[%s1 + $0x8] sm:$0xff]
    %v102 = vld [vmem:[%s1 + $0x10] sm:$0xff]
    %v103 = vld [vmem:[%s1 + $0x18] sm:$0xff]
    %v104 = vld [vmem:[%s1 + $0x20] sm:$0xff]
    %v105 = vld [vmem:[%s1 + $0x28] sm:$0xff]
    %v106 = vld [vmem:[%s1 + $0x30] sm:$0xff]
    %v107 = vld [vmem:[%s1 + $0x38] sm:$0xff]
    %vm108 = vcmask 261120
    %v110 = vsel %vm108, %v98, 0
    %v113 = vsel %vm108, %v99, 0
    %v116 = vsel %vm108, %v100, 0
    %v119 = vsel %vm108, %v101, 0
    %v122 = vsel %vm108, %v102, 0
    %v125 = vsel %vm108, %v103, 0
    %v128 = vsel %vm108, %v104, 0
    %v131 = vsel %vm108, %v105, 0
    %v134 = vsel %vm108, %v106, 0
    %v137 = vsel %vm108, %v107, 0
    %139 = vmatpush.xpose.msra.mxu0 0.0
    %140 = vmatpush.xpose.msra.mxu0 0.0
    %141 = vmatpush.xpose.msra.mxu0 0.0
    %142 = vmatpush.xpose.msra.mxu0 0.0
    %143 = vmatpush.xpose.msra.mxu0 0.0
    %144 = vmatpush.xpose.msra.mxu0 0.0
    %145 = vmatpush.xpose.msra.mxu0 0.0
    %146 = vmatpush.xpose.msra.mxu0 0.0
    %147 = vmatpush.xpose.msra.mxu0 %v137
    %148 = vmatpush.xpose.msra.mxu0 %v134
    %149 = vmatpush.xpose.msra.mxu0 %v131
    %150 = vmatpush.xpose.msra.mxu0 %v128
    %151 = vmatpush.xpose.msra.mxu0 %v125
    %152 = vmatpush.xpose.msra.mxu0 %v122
    %153 = vmatpush.xpose.msra.mxu0 %v119
    %154 = vmatpush.xpose.msra.mxu0 %v116
    %155 = vmatmul.f32.gmra.mxu0 %v110
    %v156 = vpop.f32.mrf.mxu0
    %v157 = vadd.f32 0.0, %v156
    %158 = vmatmul.f32.gmra.mxu0 %v113
    %v159 = vpop.f32.mrf.mxu0
    %v160 = vadd.f32 0.0, %v159
    %161 = vdwg.mxu0
    %v162 = vadd.f32 %v96, %v157
    %v163 = vadd.f32 %v97, %v160
    %vm164 = vcmask 523264
    %165 = vst.msk [vmem:[#allocation2] sm:$0xff] %vm164, %v162
    %166 = vst.msk [vmem:[#allocation2 + $0x8] sm:$0xff] %vm164, %v163
    // Predicated region
    $region26: #{tpu_custom_call.1} parent=1 // pred_check
      %p167 = pneg %p21
    $region27: #{tpu_custom_call.1} parent=1 // pred_check_branch
      %169 = sbr.rel (%p167) target = $region29
    $region28: #{tpu_custom_call.1} parent=1 // pred_region
      %v170 = vld [vmem:[#allocation2] sm:$0xff]
      %v171 = vld [vmem:[#allocation2 + $0x8] sm:$0xff]
      %172 = vst.msk [vmem:[#allocation3] sm:$0xff] %vm164, %v170
      %173 = vst.msk [vmem:[#allocation3 + $0x8] sm:$0xff] %vm164, %v171
    $region29: #{tpu_custom_call.1} parent=1 // pred_fallthru
      _
    // Predicated region
    $region30: #{tpu_custom_call.1} parent=1 // pred_check
      _
    $region31: #{tpu_custom_call.1} parent=1 // pred_check_branch
      %175 = sbr.rel (0) target = $region33
    $region32: #{tpu_custom_call.1} parent=1 // pred_region
      %177 = vsyncadd [#allocation4], 0
      %s178 = sshll.u32 [#allocation3], 4
      %s179 = int_to_ptr.vmem [resolvable:$true] %s178
      %s180 = sshll.u32 %s5, 4
      %s181 = int_to_ptr.hbm [resolvable:$true] %s180
      %186 = dma.vmem_to_hbm [thread:$0]  %s179, 256, %s181, [#allocation4], 128, 128, 8
    $region33: #{tpu_custom_call.1} parent=1 // pred_fallthru
      _
    // Predicated region
    $region34: #{tpu_custom_call.1} parent=1 // pred_check
      _
    $region35: #{tpu_custom_call.1} parent=1 // pred_check_branch
      %188 = sbr.rel (0) target = $region37
    $region36: #{tpu_custom_call.1} parent=1 // pred_region
      %190 = dma.done [#allocation4], 256
    $region37: #{tpu_custom_call.1} parent=1 // pred_fallthru
      _
    %191 = vsyncpa [#allocation4], 1

</llo_original>
